<compile_context>
chip_gen: v7x
topology: tpu7x:2x2x1
jax: 0.10.0
libtpu: 0.0.40
codegen_flags: <defaults>
</compile_context>

<pallas_src>
import functools

import jax
import jax.numpy as jnp
from jax.experimental import pallas as pl
from jax.experimental.pallas import tpu as pltpu

_FUSED_MAX_NODES = 1024  # padded dense adjacency (bf16) <= ~2 MiB -> keep fully in VMEM


def _round_up(a, b):
    return (a + b - 1) // b * b


def _pad2(a, rows, cols):
    return jnp.pad(a, ((0, rows - a.shape[0]), (0, cols - a.shape[1])))


def _log_softmax_masked(logits, d_out):
    """log_softmax over the lane axis, masking zero-padded class lanes."""
    lane = jax.lax.broadcasted_iota(jnp.int32, logits.shape, dimension=1)
    logits = jnp.where(lane < d_out, logits, -1e30)
    m = jnp.max(logits, axis=-1, keepdims=True)
    shifted = logits - m
    lse = jnp.log(jnp.sum(jnp.exp(shifted), axis=-1, keepdims=True))
    return shifted - lse


# --------------------------------------------------------------------------------------
# Fused path: whole forward in one pallas_call (adjacency resident in VMEM).
# --------------------------------------------------------------------------------------
def _gcn_fused_kernel(adj_ref, x_ref, w1_ref, w2_ref, out_ref, *, d_out):
    adj = adj_ref[...]
    # Layer 1 re-associated: (adj @ x) @ W1.
    ax = jnp.dot(adj, x_ref[...], preferred_element_type=jnp.float32)
    h = jnp.maximum(
        jnp.dot(ax.astype(jnp.bfloat16), w1_ref[...],
                preferred_element_type=jnp.float32), 0.0)
    # TODO(synk): nn.Dropout(0.5) is identity in eval mode; training-mode dropout
    # (pltpu.prng_random_bits mask) is not implemented here.
    t = jnp.dot(h.astype(jnp.bfloat16), w2_ref[...],
                preferred_element_type=jnp.float32)
    logits = jnp.dot(adj, t.astype(jnp.bfloat16),
                     preferred_element_type=jnp.float32)
    out_ref[...] = _log_softmax_masked(logits, d_out).astype(out_ref.dtype)


def _forward_fused(x, adj, w1, w2):
    n, d_in = x.shape
    h_dim = w1.shape[1]
    d_out = w2.shape[1]

    n_pad = _round_up(max(n, 8), 128)
    din_p = _round_up(d_in, 128)
    h_p = _round_up(h_dim, 128)
    dout_p = _round_up(d_out, 128)

    adj_b = _pad2(adj, n_pad, n_pad).astype(jnp.bfloat16)
    x_b = _pad2(x, n_pad, din_p).astype(jnp.bfloat16)
    w1_b = _pad2(w1, din_p, h_p).astype(jnp.bfloat16)
    w2_b = _pad2(w2, h_p, dout_p).astype(jnp.bfloat16)

    out_p = pl.pallas_call(
        functools.partial(_gcn_fused_kernel, d_out=d_out),
        out_shape=jax.ShapeDtypeStruct((n_pad, dout_p), jnp.float32),
        grid_spec=pltpu.PrefetchScalarGridSpec(
            num_scalar_prefetch=0,
            grid=(1,),
            in_specs=[
                pl.BlockSpec((n_pad, n_pad), lambda i: (0, 0)),
                pl.BlockSpec((n_pad, din_p), lambda i: (0, 0)),
                pl.BlockSpec((din_p, h_p), lambda i: (0, 0)),
                pl.BlockSpec((h_p, dout_p), lambda i: (0, 0)),
            ],
            out_specs=pl.BlockSpec((n_pad, dout_p), lambda i: (0, 0)),
        ),
        compiler_params=pltpu.CompilerParams(
            dimension_semantics=("arbitrary",)),
    )(adj_b, x_b, w1_b, w2_b)

    return out_p[:n, :d_out]


# --------------------------------------------------------------------------------------
# Tiled path: two pallas_calls, adjacency streamed through VMEM tiles.
# --------------------------------------------------------------------------------------
def _gcn_layer1_kernel(adj_ref, x_ref, w1_ref, w2_ref, t_ref, acc_ref):
    """t[i] = relu((adj[i,:] @ x) @ W1) @ W2, accumulated over the K (column) axis."""
    k = pl.program_id(1)

    @pl.when(k == 0)
    def _():
        acc_ref[...] = jnp.zeros_like(acc_ref)

    acc_ref[...] += jnp.dot(adj_ref[...], x_ref[...],
                            preferred_element_type=jnp.float32)

    @pl.when(k == pl.num_programs(1) - 1)
    def _():
        ax = acc_ref[...].astype(jnp.bfloat16)
        h = jnp.maximum(
            jnp.dot(ax, w1_ref[...], preferred_element_type=jnp.float32), 0.0)
        # TODO(synk): nn.Dropout(0.5) is identity in eval mode; training-mode dropout
        # is not implemented here.
        t = jnp.dot(h.astype(jnp.bfloat16), w2_ref[...],
                    preferred_element_type=jnp.float32)
        t_ref[...] = t.astype(t_ref.dtype)


def _gcn_layer2_kernel(adj_ref, t_ref, out_ref, acc_ref, *, d_out):
    """out[i] = log_softmax(adj[i,:] @ t), accumulated over the K (column) axis."""
    k = pl.program_id(1)

    @pl.when(k == 0)
    def _():
        acc_ref[...] = jnp.zeros_like(acc_ref)

    acc_ref[...] += jnp.dot(adj_ref[...], t_ref[...],
                            preferred_element_type=jnp.float32)

    @pl.when(k == pl.num_programs(1) - 1)
    def _():
        out_ref[...] = _log_softmax_masked(acc_ref[...], d_out).astype(out_ref.dtype)


def _forward_tiled(x, adj, w1, w2):
    n, d_in = x.shape
    h_dim = w1.shape[1]
    d_out = w2.shape[1]

    n8 = _round_up(n, 8)
    tm = min(256, n8)          # adj/output row tile
    tk = tm                    # adj column (K) tile; equal so one N padding works
    n_pad = _round_up(n, tm)
    din_p = _round_up(d_in, 128)
    h_p = _round_up(h_dim, 128)
    dout_p = _round_up(d_out, 128)

    adj_b = _pad2(adj, n_pad, n_pad).astype(jnp.bfloat16)
    x_b = _pad2(x, n_pad, din_p).astype(jnp.bfloat16)
    w1_b = _pad2(w1, din_p, h_p).astype(jnp.bfloat16)
    w2_b = _pad2(w2, h_p, dout_p).astype(jnp.bfloat16)

    n_i = n_pad // tm
    n_k = n_pad // tk

    cparams = pltpu.CompilerParams(
        dimension_semantics=("parallel", "arbitrary"))

    # ---- call 1: t = relu((adj @ x) @ W1) @ W2, lane-dense (n_pad, 128) bf16 ----
    t = pl.pallas_call(
        _gcn_layer1_kernel,
        out_shape=jax.ShapeDtypeStruct((n_pad, dout_p), jnp.bfloat16),
        grid_spec=pltpu.PrefetchScalarGridSpec(
            num_scalar_prefetch=0,
            grid=(n_i, n_k),
            in_specs=[
                pl.BlockSpec((tm, tk), lambda i, k: (i, k)),       # adj row/col tile
                pl.BlockSpec((tk, din_p), lambda i, k: (k, 0)),    # x row tile
                pl.BlockSpec((din_p, h_p), lambda i, k: (0, 0)),   # W1 resident
                pl.BlockSpec((h_p, dout_p), lambda i, k: (0, 0)),  # W2 resident
            ],
            out_specs=pl.BlockSpec((tm, dout_p), lambda i, k: (i, 0)),
            scratch_shapes=[pltpu.VMEM((tm, din_p), jnp.float32)],
        ),
        compiler_params=cparams,
    )(adj_b, x_b, w1_b, w2_b)

    # ---- call 2: out = log_softmax(adj @ t), lane-dense (n_pad, 128) f32 ----
    out_p = pl.pallas_call(
        functools.partial(_gcn_layer2_kernel, d_out=d_out),
        out_shape=jax.ShapeDtypeStruct((n_pad, dout_p), jnp.float32),
        grid_spec=pltpu.PrefetchScalarGridSpec(
            num_scalar_prefetch=0,
            grid=(n_i, n_k),
            in_specs=[
                pl.BlockSpec((tm, tk), lambda i, k: (i, k)),       # adj row/col tile
                pl.BlockSpec((tk, dout_p), lambda i, k: (k, 0)),   # t row tile
            ],
            out_specs=pl.BlockSpec((tm, dout_p), lambda i, k: (i, 0)),
            scratch_shapes=[pltpu.VMEM((tm, dout_p), jnp.float32)],
        ),
        compiler_params=cparams,
    )(adj_b, t)

    return out_p[:n, :d_out]


def graph_classifier_forward(x, adj, w1, w2, *, fused_max_nodes=_FUSED_MAX_NODES):
    n = x.shape[0]
    if n <= fused_max_nodes:
        return _forward_fused(x, adj, w1, w2)
    return _forward_tiled(x, adj, w1, w2)


# --------------------------------------------------------------------------------------
# Test harness
# --------------------------------------------------------------------------------------
def init_gcn_weight(key, in_features, out_features):
    # Matches GCNLayer.reset_parameters: uniform(-stdv, stdv), stdv = 1/sqrt(out_features)
    stdv = 1.0 / (out_features ** 0.5)
    return jax.random.uniform(
        key, (in_features, out_features), dtype=jnp.float32, minval=-stdv, maxval=stdv
    )


def _make_inputs(key, n, d_in):
    kx, kadj = jax.random.split(key)
    x = jax.random.normal(kx, (n, d_in), dtype=jnp.float32)
    # Symmetric row-normalized adjacency with self loops (deterministic).
    a_raw = (jax.random.uniform(kadj, (n, n)) > 0.5).astype(jnp.float32)
    a_sym = jnp.maximum(a_raw, a_raw.T) + jnp.eye(n, dtype=jnp.float32)
    deg = jnp.sum(a_sym, axis=1, keepdims=True)
    return x, a_sym / deg


def _reference(x, adj, w1, w2):
    h = jnp.maximum(adj @ (x @ w1), 0.0)
    return jax.nn.log_softmax(adj @ (h @ w2), axis=1)


if __name__ == "__main__":
    INPUT_DIM = 16
    HIDDEN_DIM = 32
    OUTPUT_DIM = 8

    key = jax.random.PRNGKey(0)
    kdata, kw1, kw2, kdata2 = jax.random.split(key, 4)

    w1 = init_gcn_weight(kw1, INPUT_DIM, HIDDEN_DIM)
    w2 = init_gcn_weight(kw2, HIDDEN_DIM, OUTPUT_DIM)

    # Small case (fused single-call path).
    x, adj = _make_inputs(kdata, 8, INPUT_DIM)
    out = graph_classifier_forward(x, adj, w1, w2)
    jax.block_until_ready(out)
    ref = _reference(x, adj, w1, w2)
    assert out.shape == (8, OUTPUT_DIM)
    assert jnp.allclose(out, ref, atol=5e-2, rtol=5e-2), "small fused-case mismatch"

    # Larger case (still fused path, exercises padding to 384).
    x2, adj2 = _make_inputs(kdata2, 300, INPUT_DIM)
    out2 = graph_classifier_forward(x2, adj2, w1, w2)
    jax.block_until_ready(out2)
    ref2 = _reference(x2, adj2, w1, w2)
    assert out2.shape == (300, OUTPUT_DIM)
    assert jnp.allclose(out2, ref2, atol=5e-2, rtol=5e-2), "fused-case mismatch"

    # Same inputs forced through the tiled two-call path (grid = (2, 2)).
    out3 = graph_classifier_forward(x2, adj2, w1, w2, fused_max_nodes=0)
    jax.block_until_ready(out3)
    assert out3.shape == (300, OUTPUT_DIM)
    assert jnp.allclose(out3, ref2, atol=5e-2, rtol=5e-2), "tiled-case mismatch"

    print("KERNEL_OK")
</pallas_src>

<mosaic_0001>
module attributes {stable_mosaic.version = 11 : i64} {
  func.func @_gcn_fused_kernel(%arg0: i32, %arg1: memref<128x128xbf16, #tpu.memory_space<vmem>>, %arg2: memref<128x128xbf16, #tpu.memory_space<vmem>>, %arg3: memref<128x128xbf16, #tpu.memory_space<vmem>>, %arg4: memref<128x128xbf16, #tpu.memory_space<vmem>>, %arg5: memref<128x128xf32, #tpu.memory_space<vmem>>) attributes {dimension_semantics = [#tpu.dimension_semantics<arbitrary>], iteration_bounds = array<i64: 1>, scalar_prefetch = 0 : i64, scratch_operands = 0 : i64, tpu.core_type = #tpu.core_type<tc>, window_params = [{pipeline_mode = #tpu.pipeline_mode<synchronous>, transform_indices = @transform_0, window_bounds = array<i64: 128, 128>}, {pipeline_mode = #tpu.pipeline_mode<synchronous>, transform_indices = @transform_1, window_bounds = array<i64: 128, 128>}, {pipeline_mode = #tpu.pipeline_mode<synchronous>, transform_indices = @transform_2, window_bounds = array<i64: 128, 128>}, {pipeline_mode = #tpu.pipeline_mode<synchronous>, transform_indices = @transform_3, window_bounds = array<i64: 128, 128>}, {pipeline_mode = #tpu.pipeline_mode<synchronous>, transform_indices = @transform_4, window_bounds = array<i64: 128, 128>}]} {
    %c0 = arith.constant 0 : index
    %c0_0 = arith.constant 0 : index
    %0 = vector.load %arg1[%c0, %c0_0] : memref<128x128xbf16, #tpu.memory_space<vmem>>, vector<128x128xbf16>
    %c0_1 = arith.constant 0 : index
    %c0_2 = arith.constant 0 : index
    %1 = vector.load %arg2[%c0_1, %c0_2] : memref<128x128xbf16, #tpu.memory_space<vmem>>, vector<128x128xbf16>
    %cst = arith.constant dense<0.000000e+00> : vector<128x128xf32>
    %2 = tpu.matmul %0, %1, %cst {dimension_numbers = #tpu.dot_dimension_numbers<[1], [0], [0], [1], [0, 0, 1, 1], [], []>} : vector<128x128xbf16>, vector<128x128xbf16>, vector<128x128xf32> -> vector<128x128xf32>
    %3 = arith.truncf %2 : vector<128x128xf32> to vector<128x128xbf16>
    %c0_3 = arith.constant 0 : index
    %c0_4 = arith.constant 0 : index
    %4 = vector.load %arg3[%c0_3, %c0_4] : memref<128x128xbf16, #tpu.memory_space<vmem>>, vector<128x128xbf16>
    %cst_5 = arith.constant dense<0.000000e+00> : vector<128x128xf32>
    %5 = tpu.matmul %3, %4, %cst_5 {dimension_numbers = #tpu.dot_dimension_numbers<[1], [0], [0], [1], [0, 0, 1, 1], [], []>} : vector<128x128xbf16>, vector<128x128xbf16>, vector<128x128xf32> -> vector<128x128xf32>
    %cst_6 = arith.constant 0.000000e+00 : f32
    %6 = vector.broadcast %cst_6 : f32 to vector<128x128xf32>
    %7 = arith.maximumf %5, %6 : vector<128x128xf32>
    %8 = arith.truncf %7 : vector<128x128xf32> to vector<128x128xbf16>
    %c0_7 = arith.constant 0 : index
    %c0_8 = arith.constant 0 : index
    %9 = vector.load %arg4[%c0_7, %c0_8] : memref<128x128xbf16, #tpu.memory_space<vmem>>, vector<128x128xbf16>
    %cst_9 = arith.constant dense<0.000000e+00> : vector<128x128xf32>
    %10 = tpu.matmul %8, %9, %cst_9 {dimension_numbers = #tpu.dot_dimension_numbers<[1], [0], [0], [1], [0, 0, 1, 1], [], []>} : vector<128x128xbf16>, vector<128x128xbf16>, vector<128x128xf32> -> vector<128x128xf32>
    %11 = arith.truncf %10 : vector<128x128xf32> to vector<128x128xbf16>
    %cst_10 = arith.constant dense<0.000000e+00> : vector<128x128xf32>
    %12 = tpu.matmul %0, %11, %cst_10 {dimension_numbers = #tpu.dot_dimension_numbers<[1], [0], [0], [1], [0, 0, 1, 1], [], []>} : vector<128x128xbf16>, vector<128x128xbf16>, vector<128x128xf32> -> vector<128x128xf32>
    %13 = tpu.iota {dimensions = array<i32: 1>} : vector<128x128xi32>
    %c8_i32 = arith.constant 8 : i32
    %14 = vector.broadcast %c8_i32 : i32 to vector<128x128xi32>
    %15 = arith.cmpi slt, %13, %14 : vector<128x128xi32>
    %cst_11 = arith.constant -1.000000e+30 : f32
    %16 = vector.broadcast %cst_11 : f32 to vector<128x128xf32>
    %17 = arith.select %15, %12, %16 : vector<128x128xi1>, vector<128x128xf32>
    %cst_12 = arith.constant dense<0xFF800000> : vector<128xf32>
    %18 = vector.multi_reduction <maximumf>, %17, %cst_12 [1] : vector<128x128xf32> to vector<128xf32>
    %19 = vector.shape_cast %18 : vector<128xf32> to vector<128x1xf32>
    %20 = vector.broadcast %19 : vector<128x1xf32> to vector<128x128xf32>
    %21 = arith.subf %17, %20 : vector<128x128xf32>
    %22 = math.exp %21 : vector<128x128xf32>
    %cst_13 = arith.constant dense<0.000000e+00> : vector<128xf32>
    %23 = vector.multi_reduction <add>, %22, %cst_13 [1] : vector<128x128xf32> to vector<128xf32>
    %24 = vector.shape_cast %23 : vector<128xf32> to vector<128x1xf32>
    %25 = math.log %24 : vector<128x1xf32>
    %26 = vector.broadcast %25 : vector<128x1xf32> to vector<128x128xf32>
    %27 = arith.subf %21, %26 : vector<128x128xf32>
    %c0_14 = arith.constant 0 : index
    %c0_15 = arith.constant 0 : index
    %28 = vector.load %arg5[%c0_14, %c0_15] : memref<128x128xf32, #tpu.memory_space<vmem>>, vector<128x128xf32>
    tpu.vector_store %arg5[%c0_14, %c0_15], %27 {strides = array<i32>} : memref<128x128xf32, #tpu.memory_space<vmem>>, vector<128x128xf32>,
    return
  }
  func.func @transform_0(%arg0: i32) -> (i32, i32) {
    %c0_i32 = arith.constant 0 : i32
    %c0_i32_0 = arith.constant 0 : i32
    %c0_i32_1 = arith.constant 0 : i32
    return %c0_i32, %c0_i32_0 : i32, i32
  }
  func.func @transform_1(%arg0: i32) -> (i32, i32) {
    %c0_i32 = arith.constant 0 : i32
    %c0_i32_0 = arith.constant 0 : i32
    %c0_i32_1 = arith.constant 0 : i32
    return %c0_i32, %c0_i32_0 : i32, i32
  }
  func.func @transform_2(%arg0: i32) -> (i32, i32) {
    %c0_i32 = arith.constant 0 : i32
    %c0_i32_0 = arith.constant 0 : i32
    %c0_i32_1 = arith.constant 0 : i32
    return %c0_i32, %c0_i32_0 : i32, i32
  }
  func.func @transform_3(%arg0: i32) -> (i32, i32) {
    %c0_i32 = arith.constant 0 : i32
    %c0_i32_0 = arith.constant 0 : i32
    %c0_i32_1 = arith.constant 0 : i32
    return %c0_i32, %c0_i32_0 : i32, i32
  }
  func.func @transform_4(%arg0: i32) -> (i32, i32) {
    %c0_i32 = arith.constant 0 : i32
    %c0_i32_0 = arith.constant 0 : i32
    %c0_i32_1 = arith.constant 0 : i32
    return %c0_i32, %c0_i32_0 : i32, i32
  }
}

</mosaic_0001>

<llo_original>
// kernel: tpu_custom_call.1
$region0: #{tpu_custom_call.1}
  #allocation0 [shape = 'u32[]', space=smem, size = 0x4, offset = 0x4, fixed_abs, tag = 'smem constant byte address 0x4 - core index']
  #allocation1 [shape = 'u32[144,128]{1,0:T(1,128)}', space=vmem, size = 0x12000, scoped, tag = 'internal scratch']
  %s0 = inlined_call_operand.hbm [shape: bf16[128,128], index: 0, kind: input, shape index: {}]
  %s1 = inlined_call_operand.hbm [shape: bf16[128,128], index: 1, kind: input, shape index: {}]
  %s2 = inlined_call_operand.hbm [shape: bf16[128,128], index: 2, kind: input, shape index: {}]
  %s3 = inlined_call_operand.hbm [shape: bf16[128,128], index: 3, kind: input, shape index: {}]
  %s4 = inlined_call_operand.hbm [shape: f32[128,128], index: 4, kind: output, shape index: {}]
  %s5 = sld [smem:[#allocation0]]
  $region42: #{tpu_custom_call.1} parent=0
    _
  %s7 = ssub.s32 1, %s5
  %s8 = scalar_select 0, %s7, %s5
  $region1: #{tpu_custom_call.1} parent=0
    #allocation2 [shape = 'u8[32768]{0}', space=vmem, size = 0x8000, scoped, tag = 'input window, operand 0, single buffered']
    #allocation3 [shape = 's32[1]{0}', space=sflag, size = 0x4, scoped, tag = 'scoped memory for tpu_custom_call.1']
    #allocation4 [shape = 's32[1]{0}', space=sflag, size = 0x4, scoped, tag = 'scoped memory for tpu_custom_call.1']
    #allocation5 [shape = 'u8[32768]{0}', space=vmem, size = 0x8000, scoped, tag = 'input window, operand 1, single buffered']
    #allocation6 [shape = 's32[1]{0}', space=sflag, size = 0x4, scoped, tag = 'scoped memory for tpu_custom_call.1']
    #allocation7 [shape = 'u8[32768]{0}', space=vmem, size = 0x8000, scoped, tag = 'input window, operand 2, single buffered']
    #allocation8 [shape = 'u8[32768]{0}', space=vmem, size = 0x8000, scoped, tag = 'input window, operand 3, single buffered']
    #allocation9 [shape = 's32[1]{0}', space=sflag, size = 0x4, scoped, tag = 'scoped memory for tpu_custom_call.1']
    #allocation10 [shape = 'u8[65536]{0}', space=vmem, size = 0x10000, scoped, tag = 'output window, operand 0, single buffered']
    %9 = vsyncpa [#allocation3], 0
    %10 = vsyncpa [#allocation6], 0
    %11 = vsyncpa [#allocation9], 0
    %12 = vsyncpa [#allocation4], 0
    // Predicated region
    $region2: #{tpu_custom_call.1} parent=1 // pred_check
      _
    $region3: #{tpu_custom_call.1} parent=1 // pred_check_branch
      %14 = sbr.rel (0) target = $region5
    $region4: #{tpu_custom_call.1} parent=1 // pred_region
      %s16 = ssub.s32 1024, 1024
      %17 = vsyncadd [#allocation3], %s16
      %s18 = sshll.u32 [#allocation2], 4
      %s19 = int_to_ptr.vmem [resolvable:$true] %s18
      %24 = dma.hbm_to_vmem [thread:$0]  %s0, 1024, %s19, [#allocation3], 64, 64, 4
    $region5: #{tpu_custom_call.1} parent=1 // pred_fallthru
      _
    // Predicated region
    $region6: #{tpu_custom_call.1} parent=1 // pred_check
      _
    $region7: #{tpu_custom_call.1} parent=1 // pred_check_branch
      %26 = sbr.rel (0) target = $region9
    $region8: #{tpu_custom_call.1} parent=1 // pred_region
      %s28 = ssub.s32 1024, 1024
      %29 = vsyncadd [#allocation6], %s28
      %s30 = sshll.u32 [#allocation5], 4
      %s31 = int_to_ptr.vmem [resolvable:$true] %s30
      %36 = dma.hbm_to_vmem [thread:$0]  %s1, 1024, %s31, [#allocation6], 64, 64, 4
    $region9: #{tpu_custom_call.1} parent=1 // pred_fallthru
      _
    // Predicated region
    $region10: #{tpu_custom_call.1} parent=1 // pred_check
      _
    $region11: #{tpu_custom_call.1} parent=1 // pred_check_branch
      %38 = sbr.rel (0) target = $region13
    $region12: #{tpu_custom_call.1} parent=1 // pred_region
      %s40 = ssub.s32 1024, 1024
      %41 = vsyncadd [#allocation6], %s40
      %s42 = sshll.u32 [#allocation7], 4
      %s43 = int_to_ptr.vmem [resolvable:$true] %s42
      %48 = dma.hbm_to_vmem [thread:$0]  %s2, 1024, %s43, [#allocation6], 64, 64, 4
    $region13: #{tpu_custom_call.1} parent=1 // pred_fallthru
      _
    // Predicated region
    $region14: #{tpu_custom_call.1} parent=1 // pred_check
      _
    $region15: #{tpu_custom_call.1} parent=1 // pred_check_branch
      %50 = sbr.rel (0) target = $region17
    $region16: #{tpu_custom_call.1} parent=1 // pred_region
      %s52 = ssub.s32 1024, 1024
      %53 = vsyncadd [#allocation9], %s52
      %s54 = sshll.u32 [#allocation8], 4
      %s55 = int_to_ptr.vmem [resolvable:$true] %s54
      %60 = dma.hbm_to_vmem [thread:$0]  %s3, 1024, %s55, [#allocation9], 64, 64, 4
    $region17: #{tpu_custom_call.1} parent=1 // pred_fallthru
      _
    // Predicated region
    $region18: #{tpu_custom_call.1} parent=1 // pred_check
      _
    $region19: #{tpu_custom_call.1} parent=1 // pred_check_branch
      %62 = sbr.rel (0) target = $region21
    $region20: #{tpu_custom_call.1} parent=1 // pred_region
      %63 = dma.done [#allocation3], 1024
    $region21: #{tpu_custom_call.1} parent=1 // pred_fallthru
      _
    // Predicated region
    $region22: #{tpu_custom_call.1} parent=1 // pred_check
      _
    $region23: #{tpu_custom_call.1} parent=1 // pred_check_branch
      %65 = sbr.rel (0) target = $region25
    $region24: #{tpu_custom_call.1} parent=1 // pred_region
      %66 = dma.done [#allocation6], 1024
    $region25: #{tpu_custom_call.1} parent=1 // pred_fallthru
      _
    // Predicated region
    $region26: #{tpu_custom_call.1} parent=1 // pred_check
      _
    $region27: #{tpu_custom_call.1} parent=1 // pred_check_branch
      %68 = sbr.rel (0) target = $region29
    $region28: #{tpu_custom_call.1} parent=1 // pred_region
      %69 = dma.done [#allocation6], 1024
    $region29: #{tpu_custom_call.1} parent=1 // pred_fallthru
      _
    // Predicated region
    $region30: #{tpu_custom_call.1} parent=1 // pred_check
      _
    $region31: #{tpu_custom_call.1} parent=1 // pred_check_branch
      %71 = sbr.rel (0) target = $region33
    $region32: #{tpu_custom_call.1} parent=1 // pred_region
      %72 = dma.done [#allocation9], 1024
    $region33: #{tpu_custom_call.1} parent=1 // pred_fallthru
      _
    %v74 = vld [vmem:[#allocation2] sm:$0xf]
    %v75 = vld [vmem:[#allocation2 + $0x4] sm:$0xf]
    %v76 = vld [vmem:[#allocation2 + $0x8] sm:$0xf]
    %v77 = vld [vmem:[#allocation2 + $0xc] sm:$0xf]
    %v78 = vld [vmem:[#allocation2 + $0x10] sm:$0xf]
    %v79 = vld [vmem:[#allocation2 + $0x14] sm:$0xf]
    %v80 = vld [vmem:[#allocation2 + $0x18] sm:$0xf]
    %v81 = vld [vmem:[#allocation2 + $0x1c] sm:$0xf]
    %v82 = vld [vmem:[#allocation2 + $0x20] sm:$0xf]
    %v83 = vld [vmem:[#allocation2 + $0x24] sm:$0xf]
    %v84 = vld [vmem:[#allocation2 + $0x28] sm:$0xf]
    %v85 = vld [vmem:[#allocation2 + $0x2c] sm:$0xf]
    %v86 = vld [vmem:[#allocation2 + $0x30] sm:$0xf]
    %v87 = vld [vmem:[#allocation2 + $0x34] sm:$0xf]
    %v88 = vld [vmem:[#allocation2 + $0x38] sm:$0xf]
    %v89 = vld [vmem:[#allocation2 + $0x3c] sm:$0xf]
    %v90 = vld [vmem:[#allocation5] sm:$0xf]
    %v91 = vld [vmem:[#allocation5 + $0x4] sm:$0xf]
    %v92 = vld [vmem:[#allocation5 + $0x8] sm:$0xf]
    %v93 = vld [vmem:[#allocation5 + $0xc] sm:$0xf]
    %v94 = vld [vmem:[#allocation5 + $0x10] sm:$0xf]
    %v95 = vld [vmem:[#allocation5 + $0x14] sm:$0xf]
    %v96 = vld [vmem:[#allocation5 + $0x18] sm:$0xf]
    %v97 = vld [vmem:[#allocation5 + $0x1c] sm:$0xf]
    %v98 = vld [vmem:[#allocation5 + $0x20] sm:$0xf]
    %v99 = vld [vmem:[#allocation5 + $0x24] sm:$0xf]
    %v100 = vld [vmem:[#allocation5 + $0x28] sm:$0xf]
    %v101 = vld [vmem:[#allocation5 + $0x2c] sm:$0xf]
    %v102 = vld [vmem:[#allocation5 + $0x30] sm:$0xf]
    %v103 = vld [vmem:[#allocation5 + $0x34] sm:$0xf]
    %v104 = vld [vmem:[#allocation5 + $0x38] sm:$0xf]
    %v105 = vld [vmem:[#allocation5 + $0x3c] sm:$0xf]
    %v122 = vunpack.c.l.b16 %v74
    %v123 = vunpack.c.l.b16 %v75
    %v124 = vunpack.c.l.b16 %v76
    %v125 = vunpack.c.l.b16 %v77
    %v126 = vunpack.c.l.b16 %v78
    %v127 = vunpack.c.l.b16 %v79
    %v128 = vunpack.c.l.b16 %v80
    %v129 = vunpack.c.l.b16 %v81
    %v130 = vunpack.c.l.b16 %v82
    %v131 = vunpack.c.l.b16 %v83
    %v132 = vunpack.c.l.b16 %v84
    %v133 = vunpack.c.l.b16 %v85
    %v134 = vunpack.c.l.b16 %v86
    %v135 = vunpack.c.l.b16 %v87
    %v136 = vunpack.c.l.b16 %v88
    %v137 = vunpack.c.l.b16 %v89
    %v138 = vpack.c.b16 %v123, %v122
    %v139 = vpack.c.b16 %v125, %v124
    %v140 = vpack.c.b16 %v127, %v126
    %v141 = vpack.c.b16 %v129, %v128
    %v142 = vpack.c.b16 %v131, %v130
    %v143 = vpack.c.b16 %v133, %v132
    %v144 = vpack.c.b16 %v135, %v134
    %v145 = vpack.c.b16 %v137, %v136
    %v170 = vunpack.c.l.b16 %v90
    %v171 = vunpack.c.l.b16 %v91
    %v172 = vunpack.c.l.b16 %v92
    %v173 = vunpack.c.l.b16 %v93
    %v174 = vunpack.c.l.b16 %v94
    %v175 = vunpack.c.l.b16 %v95
    %v176 = vunpack.c.l.b16 %v96
    %v177 = vunpack.c.l.b16 %v97
    %v178 = vunpack.c.l.b16 %v98
    %v179 = vunpack.c.l.b16 %v99
    %v180 = vunpack.c.l.b16 %v100
    %v181 = vunpack.c.l.b16 %v101
    %v182 = vunpack.c.l.b16 %v102
    %v183 = vunpack.c.l.b16 %v103
    %v184 = vunpack.c.l.b16 %v104
    %v185 = vunpack.c.l.b16 %v105
    %v186 = vpack.c.b16 %v171, %v170
    %v187 = vpack.c.b16 %v173, %v172
    %v188 = vpack.c.b16 %v175, %v174
    %v189 = vpack.c.b16 %v177, %v176
    %v190 = vpack.c.b16 %v179, %v178
    %v191 = vpack.c.b16 %v181, %v180
    %v192 = vpack.c.b16 %v183, %v182
    %v193 = vpack.c.b16 %v185, %v184
    %202 = vmatprep.subr.bf16.mxu0 0
    %203 = vmatpush1.bf16.msra.mxu0 %v186
    %204 = vmatprep.subr.bf16.mxu0 0
    %205 = vmatpush1.bf16.msra.mxu0 %v187
    %206 = vmatprep.subr.bf16.mxu0 0
    %207 = vmatpush1.bf16.msra.mxu0 %v188
    %208 = vmatprep.subr.bf16.mxu0 0
    %209 = vmatpush1.bf16.msra.mxu0 %v189
    %210 = vmatprep.subr.bf16.mxu0 0
    %211 = vmatpush1.bf16.msra.mxu0 %v190
    %212 = vmatprep.subr.bf16.mxu0 0
    %213 = vmatpush1.bf16.msra.mxu0 %v191
    %214 = vmatprep.subr.bf16.mxu0 0
    %215 = vmatpush1.bf16.msra.mxu0 %v192
    %216 = vmatprep.subr.bf16.mxu0 0
    %217 = vmatpush1.bf16.msra.mxu0 %v193
    %218 = vmatprep.subr.bf16.mxu0 0
    %219 = vmatpush1.bf16.msra.mxu0 0
    %220 = vmatprep.subr.bf16.mxu0 0
    %221 = vmatpush1.bf16.msra.mxu0 0
    %222 = vmatprep.subr.bf16.mxu0 0
    %223 = vmatpush1.bf16.msra.mxu0 0
    %224 = vmatprep.subr.bf16.mxu0 0
    %225 = vmatpush1.bf16.msra.mxu0 0
    %226 = vmatprep.subr.bf16.mxu0 0
    %227 = vmatpush1.bf16.msra.mxu0 0
    %228 = vmatprep.subr.bf16.mxu0 0
    %229 = vmatpush1.bf16.msra.mxu0 0
    %230 = vmatprep.subr.bf16.mxu0 0
    %231 = vmatpush1.bf16.msra.mxu0 0
    %232 = vmatprep.subr.bf16.mxu0 0
    %233 = vmatpush1.bf16.msra.mxu0 0
    %234 = vmatprep.mubr.bf16.mxu0 0
    %235 = vmatmul.mubr.bf16.gmra.mrb[0].mxu0 %v138
    %v236 = vpop.f32.mrb[0].mxu0
    %v237 = vadd.f32 0.0, %v236
    %v238 = vpop.f32.mrb[0].mxu0
    %v239 = vpop.f32.mrb[0].mxu0
    %v240 = vadd.f32 0.0, %v239
    %v241 = vpop.f32.mrb[0].mxu0
    %242 = vmatprep.mubr.bf16.mxu0 0
    %243 = vmatmul.mubr.bf16.gmra.mrb[0].mxu0 %v139
    %v244 = vpop.f32.mrb[0].mxu0
    %v245 = vadd.f32 0.0, %v244
    %v246 = vpop.f32.mrb[0].mxu0
    %v247 = vpop.f32.mrb[0].mxu0
    %v248 = vadd.f32 0.0, %v247
    %v249 = vpop.f32.mrb[0].mxu0
    %250 = vmatprep.mubr.bf16.mxu0 0
    %251 = vmatmul.mubr.bf16.gmra.mrb[0].mxu0 %v140
    %v252 = vpop.f32.mrb[0].mxu0
    %v253 = vadd.f32 0.0, %v252
    %v254 = vpop.f32.mrb[0].mxu0
    %v255 = vpop.f32.mrb[0].mxu0
    %v256 = vadd.f32 0.0, %v255
    %v257 = vpop.f32.mrb[0].mxu0
    %258 = vmatprep.mubr.bf16.mxu0 0
    %259 = vmatmul.mubr.bf16.gmra.mrb[0].mxu0 %v141
    %v260 = vpop.f32.mrb[0].mxu0
    %v261 = vadd.f32 0.0, %v260
    %v262 = vpop.f32.mrb[0].mxu0
    %v263 = vpop.f32.mrb[0].mxu0
    %v264 = vadd.f32 0.0, %v263
    %v265 = vpop.f32.mrb[0].mxu0
    %266 = vmatprep.mubr.bf16.mxu0 0
    %267 = vmatmul.mubr.bf16.gmra.mrb[0].mxu0 %v142
    %v268 = vpop.f32.mrb[0].mxu0
    %v269 = vadd.f32 0.0, %v268
    %v270 = vpop.f32.mrb[0].mxu0
    %v271 = vpop.f32.mrb[0].mxu0
    %v272 = vadd.f32 0.0, %v271
    %v273 = vpop.f32.mrb[0].mxu0
    %274 = vmatprep.mubr.bf16.mxu0 0
    %275 = vmatmul.mubr.bf16.gmra.mrb[0].mxu0 %v143
    %v276 = vpop.f32.mrb[0].mxu0
    %v277 = vadd.f32 0.0, %v276
    %v278 = vpop.f32.mrb[0].mxu0
    %v279 = vpop.f32.mrb[0].mxu0
    %v280 = vadd.f32 0.0, %v279
    %v281 = vpop.f32.mrb[0].mxu0
    %282 = vmatprep.mubr.bf16.mxu0 0
    %283 = vmatmul.mubr.bf16.gmra.mrb[0].mxu0 %v144
    %v284 = vpop.f32.mrb[0].mxu0
    %v285 = vadd.f32 0.0, %v284
    %v286 = vpop.f32.mrb[0].mxu0
    %v287 = vpop.f32.mrb[0].mxu0
    %v288 = vadd.f32 0.0, %v287
    %v289 = vpop.f32.mrb[0].mxu0
    %290 = vmatprep.mubr.bf16.mxu0 0
    %291 = vmatmul.mubr.bf16.gmra.mrb[0].mxu0 %v145
    %v292 = vpop.f32.mrb[0].mxu0
    %v293 = vadd.f32 0.0, %v292
    %v294 = vpop.f32.mrb[0].mxu0
    %v295 = vpop.f32.mrb[0].mxu0
    %v296 = vadd.f32 0.0, %v295
    %v297 = vpop.f32.mrb[0].mxu0
    %298 = vdwg.mxu0
    %v299 = vpack.c.bf16 %v240, %v237
    %v300 = vpack.c.bf16 %v248, %v245
    %v301 = vpack.c.bf16 %v256, %v253
    %v302 = vpack.c.bf16 %v264, %v261
    %v303 = vpack.c.bf16 %v272, %v269
    %v304 = vpack.c.bf16 %v280, %v277
    %v305 = vpack.c.bf16 %v288, %v285
    %v306 = vpack.c.bf16 %v296, %v293
    %v307 = vld [vmem:[#allocation7] sm:$0xf]
    %v308 = vld [vmem:[#allocation7 + $0x4] sm:$0xf]
    %v309 = vld [vmem:[#allocation7 + $0x8] sm:$0xf]
    %v310 = vld [vmem:[#allocation7 + $0xc] sm:$0xf]
    %v311 = vld [vmem:[#allocation7 + $0x10] sm:$0xf]
    %v312 = vld [vmem:[#allocation7 + $0x14] sm:$0xf]
    %v313 = vld [vmem:[#allocation7 + $0x18] sm:$0xf]
    %v314 = vld [vmem:[#allocation7 + $0x1c] sm:$0xf]
    %v315 = vld [vmem:[#allocation7 + $0x20] sm:$0xf]
    %v316 = vld [vmem:[#allocation7 + $0x24] sm:$0xf]
    %v317 = vld [vmem:[#allocation7 + $0x28] sm:$0xf]
    %v318 = vld [vmem:[#allocation7 + $0x2c] sm:$0xf]
    %v319 = vld [vmem:[#allocation7 + $0x30] sm:$0xf]
    %v320 = vld [vmem:[#allocation7 + $0x34] sm:$0xf]
    %v321 = vld [vmem:[#allocation7 + $0x38] sm:$0xf]
    %v322 = vld [vmem:[#allocation7 + $0x3c] sm:$0xf]
    %v339 = vunpack.c.l.b16 %v307
    %v340 = vunpack.c.l.b16 %v308
    %v341 = vunpack.c.l.b16 %v309
    %v342 = vunpack.c.l.b16 %v310
    %v343 = vunpack.c.l.b16 %v311
    %v344 = vunpack.c.l.b16 %v312
    %v345 = vunpack.c.l.b16 %v313
    %v346 = vunpack.c.l.b16 %v314
    %v347 = vunpack.c.l.b16 %v315
    %v348 = vunpack.c.l.b16 %v316
    %v349 = vunpack.c.l.b16 %v317
    %v350 = vunpack.c.l.b16 %v318
    %v351 = vunpack.c.l.b16 %v319
    %v352 = vunpack.c.l.b16 %v320
    %v353 = vunpack.c.l.b16 %v321
    %v354 = vunpack.c.l.b16 %v322
    %v355 = vpack.c.b16 %v340, %v339
    %v356 = vpack.c.b16 %v342, %v341
    %v357 = vpack.c.b16 %v344, %v343
    %v358 = vpack.c.b16 %v346, %v345
    %v359 = vpack.c.b16 %v348, %v347
    %v360 = vpack.c.b16 %v350, %v349
    %v361 = vpack.c.b16 %v352, %v351
    %v362 = vpack.c.b16 %v354, %v353
    %371 = vmatprep.subr.bf16.mxu0 0
    %372 = vmatpush1.bf16.msra.mxu0 %v355
    %373 = vmatprep.subr.bf16.mxu0 0
    %374 = vmatpush1.bf16.msra.mxu0 %v356
    %375 = vmatprep.subr.bf16.mxu0 0
    %376 = vmatpush1.bf16.msra.mxu0 %v357
    %377 = vmatprep.subr.bf16.mxu0 0
    %378 = vmatpush1.bf16.msra.mxu0 %v358
    %379 = vmatprep.subr.bf16.mxu0 0
    %380 = vmatpush1.bf16.msra.mxu0 %v359
    %381 = vmatprep.subr.bf16.mxu0 0
    %382 = vmatpush1.bf16.msra.mxu0 %v360
    %383 = vmatprep.subr.bf16.mxu0 0
    %384 = vmatpush1.bf16.msra.mxu0 %v361
    %385 = vmatprep.subr.bf16.mxu0 0
    %386 = vmatpush1.bf16.msra.mxu0 %v362
    %387 = vmatprep.subr.bf16.mxu0 0
    %388 = vmatpush1.bf16.msra.mxu0 0
    %389 = vmatprep.subr.bf16.mxu0 0
    %390 = vmatpush1.bf16.msra.mxu0 0
    %391 = vmatprep.subr.bf16.mxu0 0
    %392 = vmatpush1.bf16.msra.mxu0 0
    %393 = vmatprep.subr.bf16.mxu0 0
    %394 = vmatpush1.bf16.msra.mxu0 0
    %395 = vmatprep.subr.bf16.mxu0 0
    %396 = vmatpush1.bf16.msra.mxu0 0
    %397 = vmatprep.subr.bf16.mxu0 0
    %398 = vmatpush1.bf16.msra.mxu0 0
    %399 = vmatprep.subr.bf16.mxu0 0
    %400 = vmatpush1.bf16.msra.mxu0 0
    %401 = vmatprep.subr.bf16.mxu0 0
    %402 = vmatpush1.bf16.msra.mxu0 0
    %403 = vmatprep.mubr.bf16.mxu0 0
    %404 = vmatmul.mubr.bf16.gmra.mrb[0].mxu0 %v299
    %v405 = vpop.f32.mrb[0].mxu0
    %v406 = vadd.f32 0.0, %v405
    %v407 = vpop.f32.mrb[0].mxu0
    %v408 = vpop.f32.mrb[0].mxu0
    %v409 = vadd.f32 0.0, %v408
    %v410 = vpop.f32.mrb[0].mxu0
    %411 = vmatprep.mubr.bf16.mxu0 0
    %412 = vmatmul.mubr.bf16.gmra.mrb[0].mxu0 %v300
    %v413 = vpop.f32.mrb[0].mxu0
    %v414 = vadd.f32 0.0, %v413
    %v415 = vpop.f32.mrb[0].mxu0
    %v416 = vpop.f32.mrb[0].mxu0
    %v417 = vadd.f32 0.0, %v416
    %v418 = vpop.f32.mrb[0].mxu0
    %419 = vmatprep.mubr.bf16.mxu0 0
    %420 = vmatmul.mubr.bf16.gmra.mrb[0].mxu0 %v301
    %v421 = vpop.f32.mrb[0].mxu0
    %v422 = vadd.f32 0.0, %v421
    %v423 = vpop.f32.mrb[0].mxu0
    %v424 = vpop.f32.mrb[0].mxu0
    %v425 = vadd.f32 0.0, %v424
    %v426 = vpop.f32.mrb[0].mxu0
    %427 = vmatprep.mubr.bf16.mxu0 0
    %428 = vmatmul.mubr.bf16.gmra.mrb[0].mxu0 %v302
    %v429 = vpop.f32.mrb[0].mxu0
    %v430 = vadd.f32 0.0, %v429
    %v431 = vpop.f32.mrb[0].mxu0
    %v432 = vpop.f32.mrb[0].mxu0
    %v433 = vadd.f32 0.0, %v432
    %v434 = vpop.f32.mrb[0].mxu0
    %435 = vmatprep.mubr.bf16.mxu0 0
    %436 = vmatmul.mubr.bf16.gmra.mrb[0].mxu0 %v303
    %v437 = vpop.f32.mrb[0].mxu0
    %v438 = vadd.f32 0.0, %v437
    %v439 = vpop.f32.mrb[0].mxu0
    %v440 = vpop.f32.mrb[0].mxu0
    %v441 = vadd.f32 0.0, %v440
    %v442 = vpop.f32.mrb[0].mxu0
    %443 = vmatprep.mubr.bf16.mxu0 0
    %444 = vmatmul.mubr.bf16.gmra.mrb[0].mxu0 %v304
    %v445 = vpop.f32.mrb[0].mxu0
    %v446 = vadd.f32 0.0, %v445
    %v447 = vpop.f32.mrb[0].mxu0
    %v448 = vpop.f32.mrb[0].mxu0
    %v449 = vadd.f32 0.0, %v448
    %v450 = vpop.f32.mrb[0].mxu0
    %451 = vmatprep.mubr.bf16.mxu0 0
    %452 = vmatmul.mubr.bf16.gmra.mrb[0].mxu0 %v305
    %v453 = vpop.f32.mrb[0].mxu0
    %v454 = vadd.f32 0.0, %v453
    %v455 = vpop.f32.mrb[0].mxu0
    %v456 = vpop.f32.mrb[0].mxu0
    %v457 = vadd.f32 0.0, %v456
    %v458 = vpop.f32.mrb[0].mxu0
    %459 = vmatprep.mubr.bf16.mxu0 0
    %460 = vmatmul.mubr.bf16.gmra.mrb[0].mxu0 %v306
    %v461 = vpop.f32.mrb[0].mxu0
    %v462 = vadd.f32 0.0, %v461
    %v463 = vpop.f32.mrb[0].mxu0
    %v464 = vpop.f32.mrb[0].mxu0
    %v465 = vadd.f32 0.0, %v464
    %v466 = vpop.f32.mrb[0].mxu0
    %467 = vdwg.mxu0
    %v468 = vmax.f32 %v406, 0.0
    %v469 = vmax.f32 %v409, 0.0
    %v470 = vmax.f32 %v414, 0.0
    %v471 = vmax.f32 %v417, 0.0
    %v472 = vmax.f32 %v422, 0.0
    %v473 = vmax.f32 %v425, 0.0
    %v474 = vmax.f32 %v430, 0.0
    %v475 = vmax.f32 %v433, 0.0
    %v476 = vmax.f32 %v438, 0.0
    %v477 = vmax.f32 %v441, 0.0
    %v478 = vmax.f32 %v446, 0.0
    %v479 = vmax.f32 %v449, 0.0
    %v480 = vmax.f32 %v454, 0.0
    %v481 = vmax.f32 %v457, 0.0
    %v482 = vmax.f32 %v462, 0.0
    %v483 = vmax.f32 %v465, 0.0
    %v484 = vpack.c.bf16 %v469, %v468
    %v485 = vpack.c.bf16 %v471, %v470
    %v486 = vpack.c.bf16 %v473, %v472
    %v487 = vpack.c.bf16 %v475, %v474
    %v488 = vpack.c.bf16 %v477, %v476
    %v489 = vpack.c.bf16 %v479, %v478
    %v490 = vpack.c.bf16 %v481, %v480
    %v491 = vpack.c.bf16 %v483, %v482
    %v492 = vld [vmem:[#allocation8] sm:$0xf]
    %v493 = vld [vmem:[#allocation8 + $0x4] sm:$0xf]
    %v494 = vld [vmem:[#allocation8 + $0x8] sm:$0xf]
    %v495 = vld [vmem:[#allocation8 + $0xc] sm:$0xf]
    %v496 = vld [vmem:[#allocation8 + $0x10] sm:$0xf]
    %v497 = vld [vmem:[#allocation8 + $0x14] sm:$0xf]
    %v498 = vld [vmem:[#allocation8 + $0x18] sm:$0xf]
    %v499 = vld [vmem:[#allocation8 + $0x1c] sm:$0xf]
    %v500 = vld [vmem:[#allocation8 + $0x20] sm:$0xf]
    %v501 = vld [vmem:[#allocation8 + $0x24] sm:$0xf]
    %v502 = vld [vmem:[#allocation8 + $0x28] sm:$0xf]
    %v503 = vld [vmem:[#allocation8 + $0x2c] sm:$0xf]
    %v504 = vld [vmem:[#allocation8 + $0x30] sm:$0xf]
    %v505 = vld [vmem:[#allocation8 + $0x34] sm:$0xf]
    %v506 = vld [vmem:[#allocation8 + $0x38] sm:$0xf]
    %v507 = vld [vmem:[#allocation8 + $0x3c] sm:$0xf]
    %v524 = vunpack.c.l.b16 %v492
    %v525 = vunpack.c.l.b16 %v493
    %v526 = vunpack.c.l.b16 %v494
    %v527 = vunpack.c.l.b16 %v495
    %v528 = vunpack.c.l.b16 %v496
    %v529 = vunpack.c.l.b16 %v497
    %v530 = vunpack.c.l.b16 %v498
    %v531 = vunpack.c.l.b16 %v499
    %v532 = vunpack.c.l.b16 %v500
    %v533 = vunpack.c.l.b16 %v501
    %v534 = vunpack.c.l.b16 %v502
    %v535 = vunpack.c.l.b16 %v503
    %v536 = vunpack.c.l.b16 %v504
    %v537 = vunpack.c.l.b16 %v505
    %v538 = vunpack.c.l.b16 %v506
    %v539 = vunpack.c.l.b16 %v507
    %v540 = vpack.c.b16 %v525, %v524
    %v541 = vpack.c.b16 %v527, %v526
    %v542 = vpack.c.b16 %v529, %v528
    %v543 = vpack.c.b16 %v531, %v530
    %v544 = vpack.c.b16 %v533, %v532
    %v545 = vpack.c.b16 %v535, %v534
    %v546 = vpack.c.b16 %v537, %v536
    %v547 = vpack.c.b16 %v539, %v538
    %556 = vmatprep.subr.bf16.mxu0 0
    %557 = vmatpush1.bf16.msra.mxu0 %v540
    %558 = vmatprep.subr.bf16.mxu0 0
    %559 = vmatpush1.bf16.msra.mxu0 %v541
    %560 = vmatprep.subr.bf16.mxu0 0
    %561 = vmatpush1.bf16.msra.mxu0 %v542
    %562 = vmatprep.subr.bf16.mxu0 0
    %563 = vmatpush1.bf16.msra.mxu0 %v543
    %564 = vmatprep.subr.bf16.mxu0 0
    %565 = vmatpush1.bf16.msra.mxu0 %v544
    %566 = vmatprep.subr.bf16.mxu0 0
    %567 = vmatpush1.bf16.msra.mxu0 %v545
    %568 = vmatprep.subr.bf16.mxu0 0
    %569 = vmatpush1.bf16.msra.mxu0 %v546
    %570 = vmatprep.subr.bf16.mxu0 0
    %571 = vmatpush1.bf16.msra.mxu0 %v547
    %572 = vmatprep.subr.bf16.mxu0 0
    %573 = vmatpush1.bf16.msra.mxu0 0
    %574 = vmatprep.subr.bf16.mxu0 0
    %575 = vmatpush1.bf16.msra.mxu0 0
    %576 = vmatprep.subr.bf16.mxu0 0
    %577 = vmatpush1.bf16.msra.mxu0 0
    %578 = vmatprep.subr.bf16.mxu0 0
    %579 = vmatpush1.bf16.msra.mxu0 0
    %580 = vmatprep.subr.bf16.mxu0 0
    %581 = vmatpush1.bf16.msra.mxu0 0
    %582 = vmatprep.subr.bf16.mxu0 0
    %583 = vmatpush1.bf16.msra.mxu0 0
    %584 = vmatprep.subr.bf16.mxu0 0
    %585 = vmatpush1.bf16.msra.mxu0 0
    %586 = vmatprep.subr.bf16.mxu0 0
    %587 = vmatpush1.bf16.msra.mxu0 0
    %588 = vmatprep.mubr.bf16.mxu0 0
    %589 = vmatmul.mubr.bf16.gmra.mrb[0].mxu0 %v484
    %v590 = vpop.f32.mrb[0].mxu0
    %v591 = vadd.f32 0.0, %v590
    %v592 = vpop.f32.mrb[0].mxu0
    %v593 = vpop.f32.mrb[0].mxu0
    %v594 = vadd.f32 0.0, %v593
    %v595 = vpop.f32.mrb[0].mxu0
    %596 = vmatprep.mubr.bf16.mxu0 0
    %597 = vmatmul.mubr.bf16.gmra.mrb[0].mxu0 %v485
    %v598 = vpop.f32.mrb[0].mxu0
    %v599 = vadd.f32 0.0, %v598
    %v600 = vpop.f32.mrb[0].mxu0
    %v601 = vpop.f32.mrb[0].mxu0
    %v602 = vadd.f32 0.0, %v601
    %v603 = vpop.f32.mrb[0].mxu0
    %604 = vmatprep.mubr.bf16.mxu0 0
    %605 = vmatmul.mubr.bf16.gmra.mrb[0].mxu0 %v486
    %v606 = vpop.f32.mrb[0].mxu0
    %v607 = vadd.f32 0.0, %v606
    %v608 = vpop.f32.mrb[0].mxu0
    %v609 = vpop.f32.mrb[0].mxu0
    %v610 = vadd.f32 0.0, %v609
    %v611 = vpop.f32.mrb[0].mxu0
    %612 = vmatprep.mubr.bf16.mxu0 0
    %613 = vmatmul.mubr.bf16.gmra.mrb[0].mxu0 %v487
    %v614 = vpop.f32.mrb[0].mxu0
    %v615 = vadd.f32 0.0, %v614
    %v616 = vpop.f32.mrb[0].mxu0
    %v617 = vpop.f32.mrb[0].mxu0
    %v618 = vadd.f32 0.0, %v617
    %v619 = vpop.f32.mrb[0].mxu0
    %620 = vmatprep.mubr.bf16.mxu0 0
    %621 = vmatmul.mubr.bf16.gmra.mrb[0].mxu0 %v488
    %v622 = vpop.f32.mrb[0].mxu0
    %v623 = vadd.f32 0.0, %v622
    %v624 = vpop.f32.mrb[0].mxu0
    %v625 = vpop.f32.mrb[0].mxu0
    %v626 = vadd.f32 0.0, %v625
    %v627 = vpop.f32.mrb[0].mxu0
    %628 = vmatprep.mubr.bf16.mxu0 0
    %629 = vmatmul.mubr.bf16.gmra.mrb[0].mxu0 %v489
    %v630 = vpop.f32.mrb[0].mxu0
    %v631 = vadd.f32 0.0, %v630
    %v632 = vpop.f32.mrb[0].mxu0
    %v633 = vpop.f32.mrb[0].mxu0
    %v634 = vadd.f32 0.0, %v633
    %v635 = vpop.f32.mrb[0].mxu0
    %636 = vmatprep.mubr.bf16.mxu0 0
    %637 = vmatmul.mubr.bf16.gmra.mrb[0].mxu0 %v490
    %v638 = vpop.f32.mrb[0].mxu0
    %v639 = vadd.f32 0.0, %v638
    %v640 = vpop.f32.mrb[0].mxu0
    %v641 = vpop.f32.mrb[0].mxu0
    %v642 = vadd.f32 0.0, %v641
    %v643 = vpop.f32.mrb[0].mxu0
    %644 = vmatprep.mubr.bf16.mxu0 0
    %645 = vmatmul.mubr.bf16.gmra.mrb[0].mxu0 %v491
    %v646 = vpop.f32.mrb[0].mxu0
    %v647 = vadd.f32 0.0, %v646
    %v648 = vpop.f32.mrb[0].mxu0
    %v649 = vpop.f32.mrb[0].mxu0
    %v650 = vadd.f32 0.0, %v649
    %v651 = vpop.f32.mrb[0].mxu0
    %652 = vdwg.mxu0
    %v653 = vpack.c.bf16 %v594, %v591
    %v654 = vpack.c.bf16 %v602, %v599
    %v655 = vpack.c.bf16 %v610, %v607
    %v656 = vpack.c.bf16 %v618, %v615
    %v657 = vpack.c.bf16 %v626, %v623
    %v658 = vpack.c.bf16 %v634, %v631
    %v659 = vpack.c.bf16 %v642, %v639
    %v660 = vpack.c.bf16 %v650, %v647
    %661 = vmatprep.subr.bf16.mxu0 0
    %662 = vmatpush1.bf16.msra.mxu0 %v653
    %663 = vmatprep.subr.bf16.mxu0 0
    %664 = vmatpush1.bf16.msra.mxu0 %v654
    %665 = vmatprep.subr.bf16.mxu0 0
    %666 = vmatpush1.bf16.msra.mxu0 %v655
    %667 = vmatprep.subr.bf16.mxu0 0
    %668 = vmatpush1.bf16.msra.mxu0 %v656
    %669 = vmatprep.subr.bf16.mxu0 0
    %670 = vmatpush1.bf16.msra.mxu0 %v657
    %671 = vmatprep.subr.bf16.mxu0 0
    %672 = vmatpush1.bf16.msra.mxu0 %v658
    %673 = vmatprep.subr.bf16.mxu0 0
    %674 = vmatpush1.bf16.msra.mxu0 %v659
    %675 = vmatprep.subr.bf16.mxu0 0
    %676 = vmatpush1.bf16.msra.mxu0 %v660
    %677 = vmatprep.subr.bf16.mxu0 0
    %678 = vmatpush1.bf16.msra.mxu0 0
    %679 = vmatprep.subr.bf16.mxu0 0
    %680 = vmatpush1.bf16.msra.mxu0 0
    %681 = vmatprep.subr.bf16.mxu0 0
    %682 = vmatpush1.bf16.msra.mxu0 0
    %683 = vmatprep.subr.bf16.mxu0 0
    %684 = vmatpush1.bf16.msra.mxu0 0
    %685 = vmatprep.subr.bf16.mxu0 0
    %686 = vmatpush1.bf16.msra.mxu0 0
    %687 = vmatprep.subr.bf16.mxu0 0
    %688 = vmatpush1.bf16.msra.mxu0 0
    %689 = vmatprep.subr.bf16.mxu0 0
    %690 = vmatpush1.bf16.msra.mxu0 0
    %691 = vmatprep.subr.bf16.mxu0 0
    %692 = vmatpush1.bf16.msra.mxu0 0
    %693 = vmatprep.mubr.bf16.mxu0 0
    %694 = vmatmul.mubr.bf16.gmra.mrb[0].mxu0 %v138
    %v695 = vpop.f32.mrb[0].mxu0
    %v696 = vadd.f32 0.0, %v695
    %v697 = vpop.f32.mrb[0].mxu0
    %v698 = vpop.f32.mrb[0].mxu0
    %v699 = vadd.f32 0.0, %v698
    %v700 = vpop.f32.mrb[0].mxu0
    %701 = vmatprep.mubr.bf16.mxu0 0
    %702 = vmatmul.mubr.bf16.gmra.mrb[0].mxu0 %v139
    %v703 = vpop.f32.mrb[0].mxu0
    %v704 = vadd.f32 0.0, %v703
    %v705 = vpop.f32.mrb[0].mxu0
    %v706 = vpop.f32.mrb[0].mxu0
    %v707 = vadd.f32 0.0, %v706
    %v708 = vpop.f32.mrb[0].mxu0
    %709 = vmatprep.mubr.bf16.mxu0 0
    %710 = vmatmul.mubr.bf16.gmra.mrb[0].mxu0 %v140
    %v711 = vpop.f32.mrb[0].mxu0
    %v712 = vadd.f32 0.0, %v711
    %v713 = vpop.f32.mrb[0].mxu0
    %v714 = vpop.f32.mrb[0].mxu0
    %v715 = vadd.f32 0.0, %v714
    %v716 = vpop.f32.mrb[0].mxu0
    %717 = vmatprep.mubr.bf16.mxu0 0
    %718 = vmatmul.mubr.bf16.gmra.mrb[0].mxu0 %v141
    %v719 = vpop.f32.mrb[0].mxu0
    %v720 = vadd.f32 0.0, %v719
    %v721 = vpop.f32.mrb[0].mxu0
    %v722 = vpop.f32.mrb[0].mxu0
    %v723 = vadd.f32 0.0, %v722
    %v724 = vpop.f32.mrb[0].mxu0
    %725 = vmatprep.mubr.bf16.mxu0 0
    %726 = vmatmul.mubr.bf16.gmra.mrb[0].mxu0 %v142
    %v727 = vpop.f32.mrb[0].mxu0
    %v728 = vadd.f32 0.0, %v727
    %v729 = vpop.f32.mrb[0].mxu0
    %v730 = vpop.f32.mrb[0].mxu0
    %v731 = vadd.f32 0.0, %v730
    %v732 = vpop.f32.mrb[0].mxu0
    %733 = vmatprep.mubr.bf16.mxu0 0
    %734 = vmatmul.mubr.bf16.gmra.mrb[0].mxu0 %v143
    %v735 = vpop.f32.mrb[0].mxu0
    %v736 = vadd.f32 0.0, %v735
    %v737 = vpop.f32.mrb[0].mxu0
    %v738 = vpop.f32.mrb[0].mxu0
    %v739 = vadd.f32 0.0, %v738
    %v740 = vpop.f32.mrb[0].mxu0
    %741 = vmatprep.mubr.bf16.mxu0 0
    %742 = vmatmul.mubr.bf16.gmra.mrb[0].mxu0 %v144
    %v743 = vpop.f32.mrb[0].mxu0
    %v744 = vadd.f32 0.0, %v743
    %v745 = vpop.f32.mrb[0].mxu0
    %v746 = vpop.f32.mrb[0].mxu0
    %v747 = vadd.f32 0.0, %v746
    %v748 = vpop.f32.mrb[0].mxu0
    %749 = vmatprep.mubr.bf16.mxu0 0
    %750 = vmatmul.mubr.bf16.gmra.mrb[0].mxu0 %v145
    %v751 = vpop.f32.mrb[0].mxu0
    %v752 = vadd.f32 0.0, %v751
    %v753 = vpop.f32.mrb[0].mxu0
    %v754 = vpop.f32.mrb[0].mxu0
    %v755 = vadd.f32 0.0, %v754
    %v756 = vpop.f32.mrb[0].mxu0
    %757 = vdwg.mxu0
    %v758 = vlaneseq
    %v759 = vand.u32 %v758, 127
    %vm760 = vcmp.lt.s32.totalorder %v759, 8
    %v761 = vsel %vm760, %v696, -1e+30
    %v762 = vsel %vm760, %v699, -1e+30
    %v763 = vsel %vm760, %v704, -1e+30
    %v764 = vsel %vm760, %v707, -1e+30
    %v765 = vsel %vm760, %v712, -1e+30
    %v766 = vsel %vm760, %v715, -1e+30
    %v767 = vsel %vm760, %v720, -1e+30
    %v768 = vsel %vm760, %v723, -1e+30
    %v769 = vsel %vm760, %v728, -1e+30
    %v770 = vsel %vm760, %v731, -1e+30
    %v771 = vsel %vm760, %v736, -1e+30
    %v772 = vsel %vm760, %v739, -1e+30
    %v773 = vsel %vm760, %v744, -1e+30
    %v774 = vsel %vm760, %v747, -1e+30
    %v775 = vsel %vm760, %v752, -1e+30
    %v776 = vsel %vm760, %v755, -1e+30
    %777 = vmax.xlane.f32.xlu0 %v761
    %v778 = vpop.xlane.xlu0 %777
    %779 = vmax.xlane.f32.xlu0 %v762
    %v780 = vpop.xlane.xlu0 %779
    %781 = vmax.xlane.f32.xlu0 %v763
    %v782 = vpop.xlane.xlu0 %781
    %783 = vmax.xlane.f32.xlu0 %v764
    %v784 = vpop.xlane.xlu0 %783
    %785 = vmax.xlane.f32.xlu0 %v765
    %v786 = vpop.xlane.xlu0 %785
    %787 = vmax.xlane.f32.xlu0 %v766
    %v788 = vpop.xlane.xlu0 %787
    %789 = vmax.xlane.f32.xlu0 %v767
    %v790 = vpop.xlane.xlu0 %789
    %791 = vmax.xlane.f32.xlu0 %v768
    %v792 = vpop.xlane.xlu0 %791
    %793 = vmax.xlane.f32.xlu0 %v769
    %v794 = vpop.xlane.xlu0 %793
    %795 = vmax.xlane.f32.xlu0 %v770
    %v796 = vpop.xlane.xlu0 %795
    %797 = vmax.xlane.f32.xlu0 %v771
    %v798 = vpop.xlane.xlu0 %797
    %799 = vmax.xlane.f32.xlu0 %v772
    %v800 = vpop.xlane.xlu0 %799
    %801 = vmax.xlane.f32.xlu0 %v773
    %v802 = vpop.xlane.xlu0 %801
    %803 = vmax.xlane.f32.xlu0 %v774
    %v804 = vpop.xlane.xlu0 %803
    %805 = vmax.xlane.f32.xlu0 %v775
    %v806 = vpop.xlane.xlu0 %805
    %807 = vmax.xlane.f32.xlu0 %v776
    %v808 = vpop.xlane.xlu0 %807
    %v809 = vsub.f32 %v761, %v778
    %v810 = vsub.f32 %v762, %v780
    %v811 = vsub.f32 %v763, %v782
    %v812 = vsub.f32 %v764, %v784
    %v813 = vsub.f32 %v765, %v786
    %v814 = vsub.f32 %v766, %v788
    %v815 = vsub.f32 %v767, %v790
    %v816 = vsub.f32 %v768, %v792
    %v817 = vsub.f32 %v769, %v794
    %v818 = vsub.f32 %v770, %v796
    %v819 = vsub.f32 %v771, %v798
    %v820 = vsub.f32 %v772, %v800
    %v821 = vsub.f32 %v773, %v802
    %v822 = vsub.f32 %v774, %v804
    %v823 = vsub.f32 %v775, %v806
    %v824 = vsub.f32 %v776, %v808
    %v825 = vmul.f32 %v809, 1.442695
    %v826 = vpow.pop %v825
    %v827 = vmul.f32 %v810, 1.442695
    %v828 = vpow.pop %v827
    %v829 = vmul.f32 %v811, 1.442695
    %v830 = vpow.pop %v829
    %v831 = vmul.f32 %v812, 1.442695
    %v832 = vpow.pop %v831
    %v833 = vmul.f32 %v813, 1.442695
    %v834 = vpow.pop %v833
    %v835 = vmul.f32 %v814, 1.442695
    %v836 = vpow.pop %v835
    %v837 = vmul.f32 %v815, 1.442695
    %v838 = vpow.pop %v837
    %v839 = vmul.f32 %v816, 1.442695
    %v840 = vpow.pop %v839
    %v841 = vmul.f32 %v817, 1.442695
    %v842 = vpow.pop %v841
    %v843 = vmul.f32 %v818, 1.442695
    %v844 = vpow.pop %v843
    %v845 = vmul.f32 %v819, 1.442695
    %v846 = vpow.pop %v845
    %v847 = vmul.f32 %v820, 1.442695
    %v848 = vpow.pop %v847
    %v849 = vmul.f32 %v821, 1.442695
    %v850 = vpow.pop %v849
    %v851 = vmul.f32 %v822, 1.442695
    %v852 = vpow.pop %v851
    %v853 = vmul.f32 %v823, 1.442695
    %v854 = vpow.pop %v853
    %v855 = vmul.f32 %v824, 1.442695
    %v856 = vpow.pop %v855
    %857 = vadd.xlane.f32.xlu0 %v826
    %v858 = vpop.xlane.xlu0 %857
    %859 = vadd.xlane.f32.xlu0 %v828
    %v860 = vpop.xlane.xlu0 %859
    %861 = vadd.xlane.f32.xlu0 %v830
    %v862 = vpop.xlane.xlu0 %861
    %863 = vadd.xlane.f32.xlu0 %v832
    %v864 = vpop.xlane.xlu0 %863
    %865 = vadd.xlane.f32.xlu0 %v834
    %v866 = vpop.xlane.xlu0 %865
    %867 = vadd.xlane.f32.xlu0 %v836
    %v868 = vpop.xlane.xlu0 %867
    %869 = vadd.xlane.f32.xlu0 %v838
    %v870 = vpop.xlane.xlu0 %869
    %871 = vadd.xlane.f32.xlu0 %v840
    %v872 = vpop.xlane.xlu0 %871
    %873 = vadd.xlane.f32.xlu0 %v842
    %v874 = vpop.xlane.xlu0 %873
    %875 = vadd.xlane.f32.xlu0 %v844
    %v876 = vpop.xlane.xlu0 %875
    %877 = vadd.xlane.f32.xlu0 %v846
    %v878 = vpop.xlane.xlu0 %877
    %879 = vadd.xlane.f32.xlu0 %v848
    %v880 = vpop.xlane.xlu0 %879
    %881 = vadd.xlane.f32.xlu0 %v850
    %v882 = vpop.xlane.xlu0 %881
    %883 = vadd.xlane.f32.xlu0 %v852
    %v884 = vpop.xlane.xlu0 %883
    %885 = vadd.xlane.f32.xlu0 %v854
    %v886 = vpop.xlane.xlu0 %885
    %887 = vadd.xlane.f32.xlu0 %v856
    %v888 = vpop.xlane.xlu0 %887
    %v889 = vlog2.pop %v858
    %v890 = vmul.f32 %v889, 0.6931472
    %v891 = vlog2.pop %v860
    %v892 = vmul.f32 %v891, 0.6931472
    %v893 = vlog2.pop %v862
    %v894 = vmul.f32 %v893, 0.6931472
    %v895 = vlog2.pop %v864
    %v896 = vmul.f32 %v895, 0.6931472
    %v897 = vlog2.pop %v866
    %v898 = vmul.f32 %v897, 0.6931472
    %v899 = vlog2.pop %v868
    %v900 = vmul.f32 %v899, 0.6931472
    %v901 = vlog2.pop %v870
    %v902 = vmul.f32 %v901, 0.6931472
    %v903 = vlog2.pop %v872
    %v904 = vmul.f32 %v903, 0.6931472
    %v905 = vlog2.pop %v874
    %v906 = vmul.f32 %v905, 0.6931472
    %v907 = vlog2.pop %v876
    %v908 = vmul.f32 %v907, 0.6931472
    %v909 = vlog2.pop %v878
    %v910 = vmul.f32 %v909, 0.6931472
    %v911 = vlog2.pop %v880
    %v912 = vmul.f32 %v911, 0.6931472
    %v913 = vlog2.pop %v882
    %v914 = vmul.f32 %v913, 0.6931472
    %v915 = vlog2.pop %v884
    %v916 = vmul.f32 %v915, 0.6931472
    %v917 = vlog2.pop %v886
    %v918 = vmul.f32 %v917, 0.6931472
    %v919 = vlog2.pop %v888
    %v920 = vmul.f32 %v919, 0.6931472
    %v921 = vsub.f32 %v809, %v890
    %v922 = vsub.f32 %v810, %v892
    %v923 = vsub.f32 %v811, %v894
    %v924 = vsub.f32 %v812, %v896
    %v925 = vsub.f32 %v813, %v898
    %v926 = vsub.f32 %v814, %v900
    %v927 = vsub.f32 %v815, %v902
    %v928 = vsub.f32 %v816, %v904
    %v929 = vsub.f32 %v817, %v906
    %v930 = vsub.f32 %v818, %v908
    %v931 = vsub.f32 %v819, %v910
    %v932 = vsub.f32 %v820, %v912
    %v933 = vsub.f32 %v821, %v914
    %v934 = vsub.f32 %v822, %v916
    %v935 = vsub.f32 %v823, %v918
    %v936 = vsub.f32 %v824, %v920
    %937 = vst [vmem:[#allocation10] sm:$0xff] %v921
    %938 = vst [vmem:[#allocation10 + $0x8] sm:$0xff] %v922
    %939 = vst [vmem:[#allocation10 + $0x10] sm:$0xff] %v923
    %940 = vst [vmem:[#allocation10 + $0x18] sm:$0xff] %v924
    %941 = vst [vmem:[#allocation10 + $0x20] sm:$0xff] %v925
    %942 = vst [vmem:[#allocation10 + $0x28] sm:$0xff] %v926
    %943 = vst [vmem:[#allocation10 + $0x30] sm:$0xff] %v927
    %944 = vst [vmem:[#allocation10 + $0x38] sm:$0xff] %v928
    %945 = vst [vmem:[#allocation10 + $0x40] sm:$0xff] %v929
    %946 = vst [vmem:[#allocation10 + $0x48] sm:$0xff] %v930
    %947 = vst [vmem:[#allocation10 + $0x50] sm:$0xff] %v931
    %948 = vst [vmem:[#allocation10 + $0x58] sm:$0xff] %v932
    %949 = vst [vmem:[#allocation10 + $0x60] sm:$0xff] %v933
    %950 = vst [vmem:[#allocation10 + $0x68] sm:$0xff] %v934
    %951 = vst [vmem:[#allocation10 + $0x70] sm:$0xff] %v935
    %952 = vst [vmem:[#allocation10 + $0x78] sm:$0xff] %v936
    // Predicated region
    $region34: #{tpu_custom_call.1} parent=1 // pred_check
      _
    $region35: #{tpu_custom_call.1} parent=1 // pred_check_branch
      %954 = sbr.rel (0) target = $region37
    $region36: #{tpu_custom_call.1} parent=1 // pred_region
      %s956 = ssub.s32 2048, 2048
      %957 = vsyncadd [#allocation4], %s956
      %s958 = sshll.u32 [#allocation10], 4
      %s959 = int_to_ptr.vmem [resolvable:$true] %s958
      %964 = dma.vmem_to_hbm [thread:$0]  %s959, 2048, %s4, [#allocation4], 128, 128, 8
    $region37: #{tpu_custom_call.1} parent=1 // pred_fallthru
      _
    // Predicated region
    $region38: #{tpu_custom_call.1} parent=1 // pred_check
      _
    $region39: #{tpu_custom_call.1} parent=1 // pred_check_branch
      %966 = sbr.rel (0) target = $region41
    $region40: #{tpu_custom_call.1} parent=1 // pred_region
      %967 = dma.done [#allocation4], 2048
    $region41: #{tpu_custom_call.1} parent=1 // pred_fallthru
      _
    %968 = vsyncpa [#allocation3], 1
    %969 = vsyncpa [#allocation6], 1
    %970 = vsyncpa [#allocation9], 1
    %971 = vsyncpa [#allocation4], 1

</llo_original>
